<compile_context>
chip_gen: v7x
topology: tpu7x:2x2x1
jax: 0.10.0
libtpu: 0.0.40
codegen_flags: <defaults>
</compile_context>

<pallas_src>
import functools
import numpy as np
import jax
import jax.numpy as jnp
from jax.experimental import pallas as pl
from jax.experimental.pallas import tpu as pltpu

num_bond_type = 6
num_bond_direction = 3
num_atom_type = 120
num_chirality_tag = 3

LANE = 128
BN_EPS = 1e-5
VMEM_LIMIT = 32 * 1024 * 1024   # safe on v5e/v6e (128 MiB) and v7x (64 MiB)


def _round_up(x, m):
    return ((x + m - 1) // m) * m


def _pad2(x, shape):
    return jnp.pad(x, [(0, t - s) for s, t in zip(x.shape, shape)])


# --------------------------------------------------------------------------
# Kernel 1: fused GIN stack (all layers in one pallas_call, grid=(num_layer,))
#   per layer:
#     aggr = A @ h + eagg[l]                        (neighbor aggregation, 'add')
#     hid  = relu(aggr @ W1[l] + b1[l])             (GIN MLP)
#     out  = hid  @ W2[l] + b2[l]
#     out  = BatchNorm1d(out)  (batch stats, eps=1e-5, folded scale/shift)
#     out  = relu(out)  unless last layer           (dropout p=0 -> identity)
#   h is carried across layers in the VMEM-resident output block.
# --------------------------------------------------------------------------
def gin_fused_kernel(h0_ref, a_ref, eagg_ref, w1_ref, b1_ref, w2_ref, b2_ref,
                     gamma_ref, beta_ref, o_ref, *, bn_eps):
    l = pl.program_id(0)

    @pl.when(l == 0)
    def _():
        o_ref[...] = h0_ref[...]          # seed the carried state with the input embedding

    h = o_ref[...]
    aggr = jnp.dot(a_ref[...], h, preferred_element_type=jnp.float32) + eagg_ref[0]
    hid = jnp.maximum(
        jnp.dot(aggr, w1_ref[0], preferred_element_type=jnp.float32) + b1_ref[0], 0.0)
    out = jnp.dot(hid, w2_ref[0], preferred_element_type=jnp.float32) + b2_ref[0]

    # BatchNorm1d (training-mode batch statistics, biased variance), folded affine.
    mean = jnp.mean(out, axis=0, keepdims=True)
    var = jnp.mean(jnp.square(out - mean), axis=0, keepdims=True)
    scale = gamma_ref[0] * jax.lax.rsqrt(var + bn_eps)
    shift = beta_ref[0] - mean * scale
    out = out * scale + shift

    is_last = l == pl.num_programs(0) - 1

    @pl.when(is_last)
    def _():
        o_ref[...] = out

    @pl.when(jnp.logical_not(is_last))
    def _():
        o_ref[...] = jnp.maximum(out, 0.0)


def fused_gin_layers(h0p, adj, eagg_all, w1_all, b1_all, w2_all, b2_all,
                     gamma_all, beta_all):
    L, N, Dp = eagg_all.shape
    Hp = w1_all.shape[2]
    args = (h0p, adj, eagg_all, w1_all, b1_all, w2_all, b2_all, gamma_all, beta_all)
    flops = L * (2 * N * N * Dp + 2 * N * Dp * Hp + 2 * N * Hp * Dp)
    bytes_acc = (sum(int(np.prod(a.shape)) for a in args) + N * Dp) * 4
    kern = functools.partial(gin_fused_kernel, bn_eps=BN_EPS)
    return pl.pallas_call(
        kern,
        out_shape=jax.ShapeDtypeStruct((N, Dp), jnp.float32),
        grid_spec=pltpu.PrefetchScalarGridSpec(
            num_scalar_prefetch=0,
            grid=(L,),
            in_specs=[
                pl.BlockSpec((N, Dp), lambda l: (0, 0)),        # h0 (loaded once)
                pl.BlockSpec((N, N), lambda l: (0, 0)),         # adjacency (resident)
                pl.BlockSpec((1, N, Dp), lambda l: (l, 0, 0)),  # per-layer edge aggr
                pl.BlockSpec((1, Dp, Hp), lambda l: (l, 0, 0)),
                pl.BlockSpec((1, 1, Hp), lambda l: (l, 0, 0)),
                pl.BlockSpec((1, Hp, Dp), lambda l: (l, 0, 0)),
                pl.BlockSpec((1, 1, Dp), lambda l: (l, 0, 0)),
                pl.BlockSpec((1, 1, Dp), lambda l: (l, 0, 0)),
                pl.BlockSpec((1, 1, Dp), lambda l: (l, 0, 0)),
            ],
            out_specs=pl.BlockSpec((N, Dp), lambda l: (0, 0)),  # carried hidden state
        ),
        compiler_params=pltpu.CompilerParams(
            dimension_semantics=("arbitrary",),   # layer axis is a recurrence
            vmem_limit_bytes=VMEM_LIMIT),
        cost_estimate=pl.CostEstimate(flops=flops, transcendentals=L * Dp,
                                      bytes_accessed=bytes_acc),
    )(*args)
    # TODO(synk): for very large N, add a node-row 'parallel' grid axis with a
    # cross-tile two-pass BN reduction (per-tile BN would change numerics), and
    # optionally cast the adjacency operand to bf16 (exact) for the MXU fast path.


# --------------------------------------------------------------------------
# Kernel 2: uniformity head + uniformity loss
#   eb   = relu(node_rep @ Wu)            (Linear, no bias)
#   nrm  = F.normalize(eb)                (L2 per row, eps=1e-12)
#   loss = log(mean(exp(2*t*(nrm @ nrm.T - 1))))      (Gram via dot_general, no .T)
# --------------------------------------------------------------------------
def uniformity_kernel(rep_ref, wu_ref, loss_ref, *, t):
    rep = rep_ref[...]
    eb = jnp.maximum(jnp.dot(rep, wu_ref[...], preferred_element_type=jnp.float32), 0.0)
    sumsq = jnp.sum(eb * eb, axis=-1, keepdims=True)
    nrm = eb * jax.lax.rsqrt(jnp.maximum(sumsq, 1e-24))   # == x / max(||x||, 1e-12)
    sim = jax.lax.dot_general(nrm, nrm, (((1,), (1,)), ((), ())),
                              preferred_element_type=jnp.float32)
    loss_ref[0, 0] = jnp.log(jnp.mean(jnp.exp(2.0 * t * (sim - 1.0))))


def uniformity(rep, wu, *, t):
    N, Dp = rep.shape
    Up = wu.shape[1]
    kern = functools.partial(uniformity_kernel, t=float(t))
    ce = pl.CostEstimate(flops=2 * N * Dp * Up + 2 * N * N * Up,
                         transcendentals=N * N + N,
                         bytes_accessed=(N * Dp + Dp * Up) * 4 + 4)
    loss = pl.pallas_call(
        kern,
        out_shape=jax.ShapeDtypeStruct((1, 1), jnp.float32),
        in_specs=[pl.BlockSpec(memory_space=pltpu.MemorySpace.VMEM)] * 2,
        out_specs=pl.BlockSpec(memory_space=pltpu.MemorySpace.SMEM),
        compiler_params=pltpu.CompilerParams(vmem_limit_bytes=VMEM_LIMIT),
        cost_estimate=ce,
    )(rep, wu)
    return loss[0, 0]
    # TODO(synk): for N >= a few thousand, tile the Gram over row blocks and accumulate
    # sum(exp(.)) in scratch instead of materializing the full [N,N] matrix in VMEM.


# --------------------------------------------------------------------------
# Parameters (deterministic in-script init)
# --------------------------------------------------------------------------
def xavier_uniform(key, shape):
    fan_in, fan_out = shape[0], shape[1]
    a = float(np.sqrt(6.0 / (fan_in + fan_out)))
    return jax.random.uniform(key, shape, jnp.float32, -a, a)


def init_params(key, num_layer, emb_dim, uniformity_dim):
    ks = iter(jax.random.split(key, 8 + 6 * num_layer))
    p = {
        "x_lin1_w": xavier_uniform(next(ks), (1, emb_dim)),
        "x_lin1_b": jnp.zeros((1, emb_dim), jnp.float32),
        "x_lin2_w": xavier_uniform(next(ks), (1, emb_dim)),
        "x_lin2_b": jnp.zeros((1, emb_dim), jnp.float32),
        "unif_w": xavier_uniform(next(ks), (emb_dim, uniformity_dim)),  # applied as x @ W
        "layers": [],
    }
    for _ in range(num_layer):
        p["layers"].append(dict(
            w1=xavier_uniform(next(ks), (emb_dim, 2 * emb_dim)),
            b1=jnp.zeros((1, 2 * emb_dim), jnp.float32),
            w2=xavier_uniform(next(ks), (2 * emb_dim, emb_dim)),
            b2=jnp.zeros((1, emb_dim), jnp.float32),
            edge_emb1=xavier_uniform(next(ks), (num_bond_type, emb_dim)),
            edge_emb2=xavier_uniform(next(ks), (num_bond_direction, emb_dim)),
            bn_gamma=jnp.ones((1, emb_dim), jnp.float32),
            bn_beta=jnp.zeros((1, emb_dim), jnp.float32),
        ))
    return p


class Args:
    def __init__(self, replace_rate=0.0, mask_edge=False, drop_edge_rate=0.0, lamda=1.0):
        self.replace_rate = replace_rate
        self.mask_edge = mask_edge
        self.drop_edge_rate = drop_edge_rate
        self.lamda = lamda


# --------------------------------------------------------------------------
# Full GNN.forward
# --------------------------------------------------------------------------
def gnn_forward(params, x_int, edge_index, edge_attr, masked_atom_indices,
                mask_prob, alpha_adv, args, num_layer, perm_seed=0):
    # ---- host-side masking preamble (data-dependent glue; matches torch logic) ----
    rng = np.random.default_rng(perm_seed)
    N = x_int.shape[0]
    D = params["x_lin1_w"].shape[1]
    Dp = _round_up(D, LANE)
    Hp = _round_up(2 * D, LANE)
    Up = _round_up(params["unif_w"].shape[1], LANE)

    mask_num_nodes = len(masked_atom_indices)
    num_random_mask = int(mask_num_nodes * (1.0 - alpha_adv))
    random_mask_nodes = np.asarray(masked_atom_indices[:num_random_mask])
    random_keep_nodes = np.asarray(masked_atom_indices[num_random_mask:])
    mask_ = np.array(mask_prob[:, 1], dtype=np.float32).copy()
    perm_adv = rng.permutation(N)
    adv_keep_token = perm_adv[: int(N * (1.0 - alpha_adv))]
    mask_[adv_keep_token] = 1.0
    Mask_ = mask_.reshape(-1, 1)
    adv_keep_nodes = np.nonzero(mask_)[0]
    adv_mask_nodes = np.nonzero(1.0 - mask_)[0]
    mask_nodes = np.unique(np.concatenate([random_mask_nodes, adv_mask_nodes]))
    _keep_nodes = np.intersect1d(random_keep_nodes, adv_keep_nodes)  # unused downstream

    if args.replace_rate > 0:
        # TODO(synk): replace_rate > 0 branch (noise-node substitution) not exercised here.
        raise NotImplementedError("replace_rate > 0 branch not implemented")
    out_x = x_int.astype(np.float32) * Mask_
    token_nodes = mask_nodes
    out_x[token_nodes] = np.array([119.0, 0.0], dtype=np.float32)
    x = out_x

    # labels attached to the batch (not part of the returned values)
    mask_node_label = x_int[mask_nodes]
    _node_attr_label = np.eye(119, dtype=np.float32)[mask_node_label[:, 0]]
    # args.mask_edge == False and args.drop_edge_rate == 0 -> those branches are no-ops.

    # ---- GINConv preprocessing: self loops, dense adjacency, per-layer edge aggr ----
    self_loops = np.arange(N, dtype=edge_index.dtype)
    ei = np.concatenate([edge_index, np.stack([self_loops, self_loops])], axis=1)
    self_loop_attr = np.zeros((N, 2), dtype=edge_attr.dtype)
    self_loop_attr[:, 0] = 4
    ea = np.concatenate([edge_attr, self_loop_attr], axis=0)

    # adjacency A[dst, src] (counts multi-edges) -> aggr = A @ h replaces gather/scatter
    adj = jnp.zeros((N, N), jnp.float32).at[ei[1], ei[0]].add(1.0)
    dst_idx = jnp.asarray(ei[1])
    ea_j = jnp.asarray(ea)

    eagg_list, w1l, b1l, w2l, b2l, gl, bl = [], [], [], [], [], [], []
    for lp in params["layers"]:
        eemb = (jnp.take(lp["edge_emb1"], ea_j[:, 0], axis=0)
                + jnp.take(lp["edge_emb2"], ea_j[:, 1], axis=0))        # [E, D]
        eagg = jnp.zeros((N, D), jnp.float32).at[dst_idx].add(eemb)      # segment_sum onto dst
        eagg_list.append(_pad2(eagg, (N, Dp)))
        w1l.append(_pad2(lp["w1"], (Dp, Hp)))
        b1l.append(_pad2(lp["b1"], (1, Hp)))
        w2l.append(_pad2(lp["w2"], (Hp, Dp)))
        b2l.append(_pad2(lp["b2"], (1, Dp)))
        gl.append(_pad2(lp["bn_gamma"], (1, Dp)))
        bl.append(_pad2(lp["bn_beta"], (1, Dp)))
    eagg_all = jnp.stack(eagg_list)
    w1_all, b1_all = jnp.stack(w1l), jnp.stack(b1l)
    w2_all, b2_all = jnp.stack(w2l), jnp.stack(b2l)
    gamma_all, beta_all = jnp.stack(gl), jnp.stack(bl)

    # ---- input linear embedding (tiny [N,2] x [1,D] -> plain JAX, padded to lanes) ----
    xj = jnp.asarray(x, jnp.float32)
    h0 = (xj[:, 0:1] * params["x_lin1_w"] + params["x_lin1_b"]
          + xj[:, 1:2] * params["x_lin2_w"] + params["x_lin2_b"])
    h0p = _pad2(h0, (N, Dp))

    # ---- fused GIN layer stack (single Pallas kernel over the layer grid) ----
    h_final = fused_gin_layers(h0p, adj, eagg_all, w1_all, b1_all, w2_all, b2_all,
                               gamma_all, beta_all)

    node_representation = h_final[:, :D]      # JK = 'last' (strip lane padding)
    lam = args.lamda * (1.0 - alpha_adv)
    wu_p = _pad2(params["unif_w"], (Dp, Up))
    u_loss = uniformity(h_final, wu_p, t=lam)
    return node_representation, u_loss


# --------------------------------------------------------------------------
if __name__ == "__main__":
    key = jax.random.PRNGKey(0)
    keys = jax.random.split(key, 10)

    N, E0, D, U, L = 32, 48, 32, 16, 2          # nodes, edges, emb_dim, uniformity_dim, layers

    atom_type = jax.random.randint(keys[0], (N,), 0, num_atom_type - 1)
    chirality = jax.random.randint(keys[1], (N,), 0, num_chirality_tag)
    x_int = np.asarray(jnp.stack([atom_type, chirality], axis=1))          # [N, 2] int (batch.x)

    src = jax.random.randint(keys[2], (E0,), 0, N)
    dst = jax.random.randint(keys[3], (E0,), 0, N)
    edge_index = np.asarray(jnp.stack([src, dst], axis=0))                 # [2, E0]

    bond_type = jax.random.randint(keys[4], (E0,), 0, 4)
    bond_dir = jax.random.randint(keys[5], (E0,), 0, num_bond_direction)
    edge_attr = np.asarray(jnp.stack([bond_type, bond_dir], axis=1))       # [E0, 2]

    mask_col1 = (jax.random.uniform(keys[6], (N,)) > 0.5).astype(jnp.float32)
    mask_prob = np.asarray(jnp.stack([1.0 - mask_col1, mask_col1], axis=1))  # [N, 2]
    masked_atom_indices = np.asarray(jax.random.permutation(keys[7], N))[:8]

    params = init_params(keys[8], L, D, U)
    args = Args(replace_rate=0.0, mask_edge=False, drop_edge_rate=0.0, lamda=1.0)
    alpha_adv = 0.5

    node_rep, u_loss = gnn_forward(params, x_int, edge_index, edge_attr,
                                   masked_atom_indices, mask_prob, alpha_adv, args,
                                   num_layer=L, perm_seed=0)
    node_rep, u_loss = jax.block_until_ready((node_rep, u_loss))
    assert node_rep.shape == (N, D)
    assert np.isfinite(np.asarray(node_rep)).all() and np.isfinite(float(u_loss))
    print("KERNEL_OK")
</pallas_src>

<mosaic_0001>
module attributes {stable_mosaic.version = 11 : i64} {
  func.func @gin_fused_kernel(%arg0: i32, %arg1: memref<32x128xf32, #tpu.memory_space<vmem>>, %arg2: memref<32x32xf32, #tpu.memory_space<vmem>>, %arg3: memref<1x32x128xf32, #tpu.memory_space<vmem>>, %arg4: memref<1x128x128xf32, #tpu.memory_space<vmem>>, %arg5: memref<1x1x128xf32, #tpu.memory_space<vmem>>, %arg6: memref<1x128x128xf32, #tpu.memory_space<vmem>>, %arg7: memref<1x1x128xf32, #tpu.memory_space<vmem>>, %arg8: memref<1x1x128xf32, #tpu.memory_space<vmem>>, %arg9: memref<1x1x128xf32, #tpu.memory_space<vmem>>, %arg10: memref<32x128xf32, #tpu.memory_space<vmem>>) attributes {dimension_semantics = [#tpu.dimension_semantics<arbitrary>], iteration_bounds = array<i64: 2>, scalar_prefetch = 0 : i64, scratch_operands = 0 : i64, tpu.core_type = #tpu.core_type<tc>, window_params = [{pipeline_mode = #tpu.pipeline_mode<synchronous>, transform_indices = @transform_0, window_bounds = array<i64: 32, 128>}, {pipeline_mode = #tpu.pipeline_mode<synchronous>, transform_indices = @transform_1, window_bounds = array<i64: 32, 32>}, {transform_indices = @transform_2, window_bounds = array<i64: 1, 32, 128>}, {transform_indices = @transform_3, window_bounds = array<i64: 1, 128, 128>}, {transform_indices = @transform_4, window_bounds = array<i64: 1, 1, 128>}, {transform_indices = @transform_5, window_bounds = array<i64: 1, 128, 128>}, {transform_indices = @transform_6, window_bounds = array<i64: 1, 1, 128>}, {transform_indices = @transform_7, window_bounds = array<i64: 1, 1, 128>}, {transform_indices = @transform_8, window_bounds = array<i64: 1, 1, 128>}, {pipeline_mode = #tpu.pipeline_mode<synchronous>, transform_indices = @transform_9, window_bounds = array<i64: 32, 128>}]} {
    %c0_i32 = arith.constant 0 : i32
    %0 = arith.cmpi eq, %arg0, %c0_i32 : i32
    %1 = arith.extui %0 : i1 to i32
    %c0_i32_0 = arith.constant 0 : i32
    %2 = arith.cmpi ne, %1, %c0_i32_0 : i32
    scf.if %2 {
      %c0_35 = arith.constant 0 : index
      %c0_36 = arith.constant 0 : index
      %56 = vector.load %arg1[%c0_35, %c0_36] : memref<32x128xf32, #tpu.memory_space<vmem>>, vector<32x128xf32>
      %c0_37 = arith.constant 0 : index
      %c0_38 = arith.constant 0 : index
      %57 = vector.load %arg10[%c0_37, %c0_38] : memref<32x128xf32, #tpu.memory_space<vmem>>, vector<32x128xf32>
      tpu.vector_store %arg10[%c0_37, %c0_38], %56 {strides = array<i32>} : memref<32x128xf32, #tpu.memory_space<vmem>>, vector<32x128xf32>,
    } else {
    }
    %c0 = arith.constant 0 : index
    %c0_1 = arith.constant 0 : index
    %3 = vector.load %arg10[%c0, %c0_1] : memref<32x128xf32, #tpu.memory_space<vmem>>, vector<32x128xf32>
    %c0_2 = arith.constant 0 : index
    %c0_3 = arith.constant 0 : index
    %4 = vector.load %arg2[%c0_2, %c0_3] : memref<32x32xf32, #tpu.memory_space<vmem>>, vector<32x32xf32>
    %cst = arith.constant dense<0.000000e+00> : vector<32x128xf32>
    %5 = tpu.matmul %4, %3, %cst {dimension_numbers = #tpu.dot_dimension_numbers<[1], [0], [0], [1], [0, 0, 1, 1], [], []>} : vector<32x32xf32>, vector<32x128xf32>, vector<32x128xf32> -> vector<32x128xf32>
    %c0_4 = arith.constant 0 : index
    %c0_5 = arith.constant 0 : index
    %c0_6 = arith.constant 0 : index
    %6 = vector.load %arg3[%c0_4, %c0_5, %c0_6] : memref<1x32x128xf32, #tpu.memory_space<vmem>>, vector<1x32x128xf32>
    %7 = vector.shape_cast %6 : vector<1x32x128xf32> to vector<32x128xf32>
    %8 = arith.addf %5, %7 : vector<32x128xf32>
    %c0_7 = arith.constant 0 : index
    %c0_8 = arith.constant 0 : index
    %c0_9 = arith.constant 0 : index
    %9 = vector.load %arg4[%c0_7, %c0_8, %c0_9] : memref<1x128x128xf32, #tpu.memory_space<vmem>>, vector<1x128x128xf32>
    %10 = vector.shape_cast %9 : vector<1x128x128xf32> to vector<128x128xf32>
    %cst_10 = arith.constant dense<0.000000e+00> : vector<32x128xf32>
    %11 = tpu.matmul %8, %10, %cst_10 {dimension_numbers = #tpu.dot_dimension_numbers<[1], [0], [0], [1], [0, 0, 1, 1], [], []>} : vector<32x128xf32>, vector<128x128xf32>, vector<32x128xf32> -> vector<32x128xf32>
    %c0_11 = arith.constant 0 : index
    %c0_12 = arith.constant 0 : index
    %c0_13 = arith.constant 0 : index
    %12 = vector.load %arg5[%c0_11, %c0_12, %c0_13] : memref<1x1x128xf32, #tpu.memory_space<vmem>>, vector<1x1x128xf32>
    %13 = vector.shape_cast %12 : vector<1x1x128xf32> to vector<1x128xf32>
    %14 = vector.broadcast %13 : vector<1x128xf32> to vector<32x128xf32>
    %15 = arith.addf %11, %14 : vector<32x128xf32>
    %cst_14 = arith.constant 0.000000e+00 : f32
    %16 = vector.broadcast %cst_14 : f32 to vector<32x128xf32>
    %17 = arith.maximumf %15, %16 : vector<32x128xf32>
    %c0_15 = arith.constant 0 : index
    %c0_16 = arith.constant 0 : index
    %c0_17 = arith.constant 0 : index
    %18 = vector.load %arg6[%c0_15, %c0_16, %c0_17] : memref<1x128x128xf32, #tpu.memory_space<vmem>>, vector<1x128x128xf32>
    %19 = vector.shape_cast %18 : vector<1x128x128xf32> to vector<128x128xf32>
    %cst_18 = arith.constant dense<0.000000e+00> : vector<32x128xf32>
    %20 = tpu.matmul %17, %19, %cst_18 {dimension_numbers = #tpu.dot_dimension_numbers<[1], [0], [0], [1], [0, 0, 1, 1], [], []>} : vector<32x128xf32>, vector<128x128xf32>, vector<32x128xf32> -> vector<32x128xf32>
    %c0_19 = arith.constant 0 : index
    %c0_20 = arith.constant 0 : index
    %c0_21 = arith.constant 0 : index
    %21 = vector.load %arg7[%c0_19, %c0_20, %c0_21] : memref<1x1x128xf32, #tpu.memory_space<vmem>>, vector<1x1x128xf32>
    %22 = vector.shape_cast %21 : vector<1x1x128xf32> to vector<1x128xf32>
    %23 = vector.broadcast %22 : vector<1x128xf32> to vector<32x128xf32>
    %24 = arith.addf %20, %23 : vector<32x128xf32>
    %cst_22 = arith.constant dense<0.000000e+00> : vector<128xf32>
    %25 = vector.multi_reduction <add>, %24, %cst_22 [0] : vector<32x128xf32> to vector<128xf32>
    %26 = vector.shape_cast %25 : vector<128xf32> to vector<1x128xf32>
    %cst_23 = arith.constant 3.200000e+01 : f32
    %27 = vector.broadcast %cst_23 : f32 to vector<1x128xf32>
    %28 = arith.divf %26, %27 : vector<1x128xf32>
    %29 = vector.broadcast %28 : vector<1x128xf32> to vector<32x128xf32>
    %30 = arith.subf %24, %29 : vector<32x128xf32>
    %31 = arith.mulf %30, %30 : vector<32x128xf32>
    %cst_24 = arith.constant dense<0.000000e+00> : vector<128xf32>
    %32 = vector.multi_reduction <add>, %31, %cst_24 [0] : vector<32x128xf32> to vector<128xf32>
    %33 = vector.shape_cast %32 : vector<128xf32> to vector<1x128xf32>
    %cst_25 = arith.constant 3.200000e+01 : f32
    %34 = vector.broadcast %cst_25 : f32 to vector<1x128xf32>
    %35 = arith.divf %33, %34 : vector<1x128xf32>
    %c0_26 = arith.constant 0 : index
    %c0_27 = arith.constant 0 : index
    %c0_28 = arith.constant 0 : index
    %36 = vector.load %arg8[%c0_26, %c0_27, %c0_28] : memref<1x1x128xf32, #tpu.memory_space<vmem>>, vector<1x1x128xf32>
    %37 = vector.shape_cast %36 : vector<1x1x128xf32> to vector<1x128xf32>
    %cst_29 = arith.constant 9.99999974E-6 : f32
    %38 = vector.broadcast %cst_29 : f32 to vector<1x128xf32>
    %39 = arith.addf %35, %38 : vector<1x128xf32>
    %40 = math.rsqrt %39 : vector<1x128xf32>
    %41 = arith.mulf %37, %40 : vector<1x128xf32>
    %c0_30 = arith.constant 0 : index
    %c0_31 = arith.constant 0 : index
    %c0_32 = arith.constant 0 : index
    %42 = vector.load %arg9[%c0_30, %c0_31, %c0_32] : memref<1x1x128xf32, #tpu.memory_space<vmem>>, vector<1x1x128xf32>
    %43 = vector.shape_cast %42 : vector<1x1x128xf32> to vector<1x128xf32>
    %44 = arith.mulf %28, %41 : vector<1x128xf32>
    %45 = arith.subf %43, %44 : vector<1x128xf32>
    %46 = vector.broadcast %41 : vector<1x128xf32> to vector<32x128xf32>
    %47 = arith.mulf %24, %46 : vector<32x128xf32>
    %48 = vector.broadcast %45 : vector<1x128xf32> to vector<32x128xf32>
    %49 = arith.addf %47, %48 : vector<32x128xf32>
    %c1_i32 = arith.constant 1 : i32
    %50 = arith.cmpi eq, %arg0, %c1_i32 : i32
    %51 = arith.extui %50 : i1 to i32
    %c0_i32_33 = arith.constant 0 : i32
    %52 = arith.cmpi ne, %51, %c0_i32_33 : i32
    scf.if %52 {
      %c0_35 = arith.constant 0 : index
      %c0_36 = arith.constant 0 : index
      %56 = vector.load %arg10[%c0_35, %c0_36] : memref<32x128xf32, #tpu.memory_space<vmem>>, vector<32x128xf32>
      tpu.vector_store %arg10[%c0_35, %c0_36], %49 {strides = array<i32>} : memref<32x128xf32, #tpu.memory_space<vmem>>, vector<32x128xf32>,
    } else {
    }
    %true = arith.constant true
    %53 = arith.xori %50, %true : i1
    %54 = arith.extui %53 : i1 to i32
    %c0_i32_34 = arith.constant 0 : i32
    %55 = arith.cmpi ne, %54, %c0_i32_34 : i32
    scf.if %55 {
      %cst_35 = arith.constant 0.000000e+00 : f32
      %56 = vector.broadcast %cst_35 : f32 to vector<32x128xf32>
      %57 = arith.maximumf %49, %56 : vector<32x128xf32>
      %c0_36 = arith.constant 0 : index
      %c0_37 = arith.constant 0 : index
      %58 = vector.load %arg10[%c0_36, %c0_37] : memref<32x128xf32, #tpu.memory_space<vmem>>, vector<32x128xf32>
      tpu.vector_store %arg10[%c0_36, %c0_37], %57 {strides = array<i32>} : memref<32x128xf32, #tpu.memory_space<vmem>>, vector<32x128xf32>,
    } else {
    }
    return
  }
  func.func @transform_0(%arg0: i32) -> (i32, i32) {
    %c0_i32 = arith.constant 0 : i32
    %c0_i32_0 = arith.constant 0 : i32
    %c0_i32_1 = arith.constant 0 : i32
    return %c0_i32, %c0_i32_0 : i32, i32
  }
  func.func @transform_1(%arg0: i32) -> (i32, i32) {
    %c0_i32 = arith.constant 0 : i32
    %c0_i32_0 = arith.constant 0 : i32
    %c0_i32_1 = arith.constant 0 : i32
    return %c0_i32, %c0_i32_0 : i32, i32
  }
  func.func @transform_2(%arg0: i32) -> (i32, i32, i32) {
    %c0_i32 = arith.constant 0 : i32
    %c0_i32_0 = arith.constant 0 : i32
    %c0_i32_1 = arith.constant 0 : i32
    return %arg0, %c0_i32, %c0_i32_0 : i32, i32, i32
  }
  func.func @transform_3(%arg0: i32) -> (i32, i32, i32) {
    %c0_i32 = arith.constant 0 : i32
    %c0_i32_0 = arith.constant 0 : i32
    %c0_i32_1 = arith.constant 0 : i32
    return %arg0, %c0_i32, %c0_i32_0 : i32, i32, i32
  }
  func.func @transform_4(%arg0: i32) -> (i32, i32, i32) {
    %c0_i32 = arith.constant 0 : i32
    %c0_i32_0 = arith.constant 0 : i32
    %c0_i32_1 = arith.constant 0 : i32
    return %arg0, %c0_i32, %c0_i32_0 : i32, i32, i32
  }
  func.func @transform_5(%arg0: i32) -> (i32, i32, i32) {
    %c0_i32 = arith.constant 0 : i32
    %c0_i32_0 = arith.constant 0 : i32
    %c0_i32_1 = arith.constant 0 : i32
    return %arg0, %c0_i32, %c0_i32_0 : i32, i32, i32
  }
  func.func @transform_6(%arg0: i32) -> (i32, i32, i32) {
    %c0_i32 = arith.constant 0 : i32
    %c0_i32_0 = arith.constant 0 : i32
    %c0_i32_1 = arith.constant 0 : i32
    return %arg0, %c0_i32, %c0_i32_0 : i32, i32, i32
  }
  func.func @transform_7(%arg0: i32) -> (i32, i32, i32) {
    %c0_i32 = arith.constant 0 : i32
    %c0_i32_0 = arith.constant 0 : i32
    %c0_i32_1 = arith.constant 0 : i32
    return %arg0, %c0_i32, %c0_i32_0 : i32, i32, i32
  }
  func.func @transform_8(%arg0: i32) -> (i32, i32, i32) {
    %c0_i32 = arith.constant 0 : i32
    %c0_i32_0 = arith.constant 0 : i32
    %c0_i32_1 = arith.constant 0 : i32
    return %arg0, %c0_i32, %c0_i32_0 : i32, i32, i32
  }
  func.func @transform_9(%arg0: i32) -> (i32, i32) {
    %c0_i32 = arith.constant 0 : i32
    %c0_i32_0 = arith.constant 0 : i32
    %c0_i32_1 = arith.constant 0 : i32
    return %c0_i32, %c0_i32_0 : i32, i32
  }
}

</mosaic_0001>

<llo_original>
// kernel: tpu_custom_call.1
$region0: #{tpu_custom_call.1}
  #allocation0 [shape = 'u32[]', space=smem, size = 0x4, offset = 0x4, fixed_abs, tag = 'smem constant byte address 0x4 - core index']
  #allocation1 [shape = 'u32[144,128]{1,0:T(1,128)}', space=vmem, size = 0x12000, scoped, tag = 'internal scratch']
  %s0 = inlined_call_operand.hbm [shape: f32[32,128], index: 0, kind: input, shape index: {}]
  %s1 = inlined_call_operand.hbm [shape: f32[32,32], index: 1, kind: input, shape index: {}]
  %s2 = inlined_call_operand.hbm [shape: f32[2,32,128], index: 2, kind: input, shape index: {}]
  %s3 = inlined_call_operand.hbm [shape: f32[2,128,128], index: 3, kind: input, shape index: {}]
  %s4 = inlined_call_operand.vmem [shape: f32[2,1,128], index: 4, kind: input, shape index: {}]
  %s5 = inlined_call_operand.hbm [shape: f32[2,128,128], index: 5, kind: input, shape index: {}]
  %s6 = inlined_call_operand.vmem [shape: f32[2,1,128], index: 6, kind: input, shape index: {}]
  %s7 = inlined_call_operand.vmem [shape: f32[2,1,128], index: 7, kind: input, shape index: {}]
  %s8 = inlined_call_operand.vmem [shape: f32[2,1,128], index: 8, kind: input, shape index: {}]
  %s9 = inlined_call_operand.hbm [shape: f32[32,128], index: 9, kind: output, shape index: {}]
  %s10 = sld [smem:[#allocation0]]
  $region101: #{tpu_custom_call.1} parent=0
    _
  %s12 = ssub.s32 1, %s10
  %s13 = scalar_select 0, %s12, %s10
  $region1: #{tpu_custom_call.1} parent=0
    #allocation2 [shape = 'u8[16384]{0}', space=vmem, size = 0x4000, scoped, tag = 'input window, operand 0, single buffered']
    #allocation3 [shape = 's32[2]{0}', space=sflag, size = 0x8, scoped, tag = 'scoped memory for tpu_custom_call.1']
    #allocation4 [shape = 's32[2]{0}', space=sflag, size = 0x8, scoped, tag = 'scoped memory for tpu_custom_call.1']
    #allocation5 [shape = 'u8[16384]{0}', space=vmem, size = 0x4000, scoped, tag = 'input window, operand 1, single buffered']
    #allocation6 [shape = 's32[1]{0}', space=sflag, size = 0x4, scoped, tag = 'scoped memory for tpu_custom_call.1']
    #allocation7 [shape = 'u8[32768]{0}', space=vmem, size = 0x8000, scoped, tag = 'input window, operand 2']
    #allocation8 [shape = 'u8[131072]{0}', space=vmem, size = 0x20000, scoped, tag = 'input window, operand 3']
    #allocation9 [shape = 'u8[131072]{0}', space=vmem, size = 0x20000, scoped, tag = 'input window, operand 5']
    #allocation10 [shape = 'u8[16384]{0}', space=vmem, size = 0x4000, scoped, tag = 'output window, operand 0, single buffered']
    %14 = vsyncpa [#allocation3], 0
    %15 = vsyncpa [#allocation6], 0
    %16 = vsyncpa [#allocation4], 0
    loop: start=0, step=1, limit=4
    $region2: #{tpu_custom_call.1} parent=1 // loop_pre_header
      _
    $region3: #{tpu_custom_call.1} parent=1 // loop_header
      %s18 = sphi 0, %s22
      %p19 = scmp.ge.s32.totalorder %s18, 4
      %s26 = sphi 0, %s26
      %s28 = sphi 0, %s26
      %s29 = sphi 0, %s28
      %s43 = sphi 0, %s29
      %s47 = sphi 0, %s47
      %s49 = sphi 0, %s47
      %s50 = sphi 0, %s49
      %s64 = sphi 0, %s50
      %s70 = sphi 0, %s72
      %s73 = sphi 0, %s70
      %s74 = sphi 0, %s73
      %s90 = sphi 0, %s74
      %s96 = sphi 0, %s98
      %s99 = sphi 0, %s96
      %s100 = sphi 0, %s99
      %s116 = sphi 0, %s100
      %s122 = sphi 0, %s124
      %s125 = sphi 0, %s122
      %s126 = sphi 0, %s125
      %s142 = sphi 0, %s126
      %s148 = sphi 0, %s150
      %s151 = sphi 0, %s148
      %s152 = sphi 0, %s151
      %s168 = sphi 0, %s152
      %s174 = sphi 0, %s176
      %s177 = sphi 0, %s174
      %s178 = sphi 0, %s177
      %s194 = sphi 0, %s178
      %s200 = sphi 0, %s202
      %s203 = sphi 0, %s200
      %s204 = sphi 0, %s203
      %s220 = sphi 0, %s204
      %s226 = sphi 0, %s228
      %s229 = sphi 0, %s226
      %s230 = sphi 0, %s229
      %s246 = sphi 0, %s230
      %s250 = sphi 0, %s250
      %s252 = sphi 0, %s250
      %s253 = sphi 0, %s252
      %s267 = sphi 0, %s253
    $region4: #{tpu_custom_call.1} parent=1 // loop_header_branch
      %21 = sbr.rel (%p19) target = $region8
    $region5: #{tpu_custom_call.1} parent=1 // loop_body
      %s23 = ssub.s32 %s18, 1
      %s24 = ssub.s32 %s18, 2
      %s25 = sadd.s32 %s18, 1
      %s27 = sadd.s32 %s26, 1
      %p30 = scmp.eq.s32.totalorder %s18, 1
      %p31 = scmp.ne.s32.totalorder %s26, %s28
      %p32 = scmp.eq.s32.totalorder %s18, 0
      %p33 = por %p31, %p32
      %p34 = scmp.ne.s32.totalorder %s26, %s28
      %p35 = scmp.eq.s32.totalorder %s23, 1
      %p36 = por %p34, %p35
      %p37 = scmp.ne.s32.totalorder %s28, %s29
      %p38 = scmp.eq.s32.totalorder %s23, 0
      %p39 = por %p37, %p38
      %p40 = scmp.ne.s32.totalorder %s28, %s29
      %p41 = scmp.eq.s32.totalorder %s24, 1
      %p42 = por %p40, %p41
      %p44 = scmp.ne.s32.totalorder %s29, %s43
      %p45 = scmp.eq.s32.totalorder %s24, 0
      %p46 = por %p44, %p45
      %s48 = sadd.s32 %s47, 1
      %p51 = scmp.eq.s32.totalorder %s18, 1
      %p52 = scmp.ne.s32.totalorder %s47, %s49
      %p53 = scmp.eq.s32.totalorder %s18, 0
      %p54 = por %p52, %p53
      %p55 = scmp.ne.s32.totalorder %s47, %s49
      %p56 = scmp.eq.s32.totalorder %s23, 1
      %p57 = por %p55, %p56
      %p58 = scmp.ne.s32.totalorder %s49, %s50
      %p59 = scmp.eq.s32.totalorder %s23, 0
      %p60 = por %p58, %p59
      %p61 = scmp.ne.s32.totalorder %s49, %s50
      %p62 = scmp.eq.s32.totalorder %s24, 1
      %p63 = por %p61, %p62
      %p65 = scmp.ne.s32.totalorder %s50, %s64
      %p66 = scmp.eq.s32.totalorder %s24, 0
      %p67 = por %p65, %p66
      %s68 = ssub.s32 %s18, %s25
      %p69 = scmp.eq.s32.totalorder %s68, 0
      %s71 = sadd.s32 %s70, 1
      %s72 = scalar_select %p69, %s70, %s71
      %p75 = pneg %p69
      %p76 = scmp.eq.s32.totalorder %s18, 1
      %p77 = por %p75, %p76
      %p78 = scmp.ne.s32.totalorder %s70, %s73
      %p79 = scmp.eq.s32.totalorder %s18, 0
      %p80 = por %p78, %p79
      %p81 = scmp.ne.s32.totalorder %s70, %s73
      %p82 = scmp.eq.s32.totalorder %s23, 1
      %p83 = por %p81, %p82
      %p84 = scmp.ne.s32.totalorder %s73, %s74
      %p85 = scmp.eq.s32.totalorder %s23, 0
      %p86 = por %p84, %p85
      %p87 = scmp.ne.s32.totalorder %s73, %s74
      %p88 = scmp.eq.s32.totalorder %s24, 1
      %p89 = por %p87, %p88
      %p91 = scmp.ne.s32.totalorder %s74, %s90
      %p92 = scmp.eq.s32.totalorder %s24, 0
      %p93 = por %p91, %p92
      %s94 = ssub.s32 %s18, %s25
      %p95 = scmp.eq.s32.totalorder %s94, 0
      %s97 = sadd.s32 %s96, 1
      %s98 = scalar_select %p95, %s96, %s97
      %p101 = pneg %p95
      %p102 = scmp.eq.s32.totalorder %s18, 1
      %p103 = por %p101, %p102
      %p104 = scmp.ne.s32.totalorder %s96, %s99
      %p105 = scmp.eq.s32.totalorder %s18, 0
      %p106 = por %p104, %p105
      %p107 = scmp.ne.s32.totalorder %s96, %s99
      %p108 = scmp.eq.s32.totalorder %s23, 1
      %p109 = por %p107, %p108
      %p110 = scmp.ne.s32.totalorder %s99, %s100
      %p111 = scmp.eq.s32.totalorder %s23, 0
      %p112 = por %p110, %p111
      %p113 = scmp.ne.s32.totalorder %s99, %s100
      %p114 = scmp.eq.s32.totalorder %s24, 1
      %p115 = por %p113, %p114
      %p117 = scmp.ne.s32.totalorder %s100, %s116
      %p118 = scmp.eq.s32.totalorder %s24, 0
      %p119 = por %p117, %p118
      %s120 = ssub.s32 %s18, %s25
      %p121 = scmp.eq.s32.totalorder %s120, 0
      %s123 = sadd.s32 %s122, 1
      %s124 = scalar_select %p121, %s122, %s123
      %p127 = pneg %p121
      %p128 = scmp.eq.s32.totalorder %s18, 1
      %p129 = por %p127, %p128
      %p130 = scmp.ne.s32.totalorder %s122, %s125
      %p131 = scmp.eq.s32.totalorder %s18, 0
      %p132 = por %p130, %p131
      %p133 = scmp.ne.s32.totalorder %s122, %s125
      %p134 = scmp.eq.s32.totalorder %s23, 1
      %p135 = por %p133, %p134
      %p136 = scmp.ne.s32.totalorder %s125, %s126
      %p137 = scmp.eq.s32.totalorder %s23, 0
      %p138 = por %p136, %p137
      %p139 = scmp.ne.s32.totalorder %s125, %s126
      %p140 = scmp.eq.s32.totalorder %s24, 1
      %p141 = por %p139, %p140
      %p143 = scmp.ne.s32.totalorder %s126, %s142
      %p144 = scmp.eq.s32.totalorder %s24, 0
      %p145 = por %p143, %p144
      %s146 = ssub.s32 %s18, %s25
      %p147 = scmp.eq.s32.totalorder %s146, 0
      %s149 = sadd.s32 %s148, 1
      %s150 = scalar_select %p147, %s148, %s149
      %p153 = pneg %p147
      %p154 = scmp.eq.s32.totalorder %s18, 1
      %p155 = por %p153, %p154
      %p156 = scmp.ne.s32.totalorder %s148, %s151
      %p157 = scmp.eq.s32.totalorder %s18, 0
      %p158 = por %p156, %p157
      %p159 = scmp.ne.s32.totalorder %s148, %s151
      %p160 = scmp.eq.s32.totalorder %s23, 1
      %p161 = por %p159, %p160
      %p162 = scmp.ne.s32.totalorder %s151, %s152
      %p163 = scmp.eq.s32.totalorder %s23, 0
      %p164 = por %p162, %p163
      %p165 = scmp.ne.s32.totalorder %s151, %s152
      %p166 = scmp.eq.s32.totalorder %s24, 1
      %p167 = por %p165, %p166
      %p169 = scmp.ne.s32.totalorder %s152, %s168
      %p170 = scmp.eq.s32.totalorder %s24, 0
      %p171 = por %p169, %p170
      %s172 = ssub.s32 %s18, %s25
      %p173 = scmp.eq.s32.totalorder %s172, 0
      %s175 = sadd.s32 %s174, 1
      %s176 = scalar_select %p173, %s174, %s175
      %p179 = pneg %p173
      %p180 = scmp.eq.s32.totalorder %s18, 1
      %p181 = por %p179, %p180
      %p182 = scmp.ne.s32.totalorder %s174, %s177
      %p183 = scmp.eq.s32.totalorder %s18, 0
      %p184 = por %p182, %p183
      %p185 = scmp.ne.s32.totalorder %s174, %s177
      %p186 = scmp.eq.s32.totalorder %s23, 1
      %p187 = por %p185, %p186
      %p188 = scmp.ne.s32.totalorder %s177, %s178
      %p189 = scmp.eq.s32.totalorder %s23, 0
      %p190 = por %p188, %p189
      %p191 = scmp.ne.s32.totalorder %s177, %s178
      %p192 = scmp.eq.s32.totalorder %s24, 1
      %p193 = por %p191, %p192
      %p195 = scmp.ne.s32.totalorder %s178, %s194
      %p196 = scmp.eq.s32.totalorder %s24, 0
      %p197 = por %p195, %p196
      %s198 = ssub.s32 %s18, %s25
      %p199 = scmp.eq.s32.totalorder %s198, 0
      %s201 = sadd.s32 %s200, 1
      %s202 = scalar_select %p199, %s200, %s201
      %p205 = pneg %p199
      %p206 = scmp.eq.s32.totalorder %s18, 1
      %p207 = por %p205, %p206
      %p208 = scmp.ne.s32.totalorder %s200, %s203
      %p209 = scmp.eq.s32.totalorder %s18, 0
      %p210 = por %p208, %p209
      %p211 = scmp.ne.s32.totalorder %s200, %s203
      %p212 = scmp.eq.s32.totalorder %s23, 1
      %p213 = por %p211, %p212
      %p214 = scmp.ne.s32.totalorder %s203, %s204
      %p215 = scmp.eq.s32.totalorder %s23, 0
      %p216 = por %p214, %p215
      %p217 = scmp.ne.s32.totalorder %s203, %s204
      %p218 = scmp.eq.s32.totalorder %s24, 1
      %p219 = por %p217, %p218
      %p221 = scmp.ne.s32.totalorder %s204, %s220
      %p222 = scmp.eq.s32.totalorder %s24, 0
      %p223 = por %p221, %p222
      %s224 = ssub.s32 %s18, %s25
      %p225 = scmp.eq.s32.totalorder %s224, 0
      %s227 = sadd.s32 %s226, 1
      %s228 = scalar_select %p225, %s226, %s227
      %p231 = pneg %p225
      %p232 = scmp.eq.s32.totalorder %s18, 1
      %p233 = por %p231, %p232
      %p234 = scmp.ne.s32.totalorder %s226, %s229
      %p235 = scmp.eq.s32.totalorder %s18, 0
      %p236 = por %p234, %p235
      %p237 = scmp.ne.s32.totalorder %s226, %s229
      %p238 = scmp.eq.s32.totalorder %s23, 1
      %p239 = por %p237, %p238
      %p240 = scmp.ne.s32.totalorder %s229, %s230
      %p241 = scmp.eq.s32.totalorder %s23, 0
      %p242 = por %p240, %p241
      %p243 = scmp.ne.s32.totalorder %s229, %s230
      %p244 = scmp.eq.s32.totalorder %s24, 1
      %p245 = por %p243, %p244
      %p247 = scmp.ne.s32.totalorder %s230, %s246
      %p248 = scmp.eq.s32.totalorder %s24, 0
      %p249 = por %p247, %p248
      %s251 = sadd.s32 %s250, 1
      %p254 = scmp.eq.s32.totalorder %s18, 1
      %p255 = scmp.ne.s32.totalorder %s250, %s252
      %p256 = scmp.eq.s32.totalorder %s18, 0
      %p257 = por %p255, %p256
      %p258 = scmp.ne.s32.totalorder %s250, %s252
      %p259 = scmp.eq.s32.totalorder %s23, 1
      %p260 = por %p258, %p259
      %p261 = scmp.ne.s32.totalorder %s252, %s253
      %p262 = scmp.eq.s32.totalorder %s23, 0
      %p263 = por %p261, %p262
      %p264 = scmp.ne.s32.totalorder %s252, %s253
      %p265 = scmp.eq.s32.totalorder %s24, 1
      %p266 = por %p264, %p265
      %p268 = scmp.ne.s32.totalorder %s253, %s267
      %p269 = scmp.eq.s32.totalorder %s24, 0
      %p270 = por %p268, %p269
      %p271 = scmp.le.s32.totalorder 1, %s18
      %p272 = scmp.lt.s32.totalorder %s18, 3
      %p273 = pnand %p271, %p272
      %p274 = pneg %p273
      // Predicated region
      $region9: #{tpu_custom_call.1} parent=5 // pred_check
        _
      $region10: #{tpu_custom_call.1} parent=5 // pred_check_branch
        %276 = sbr.rel (%p273) target = $region12
      $region11: #{tpu_custom_call.1} parent=5 // pred_region
        %s277 = ssub.s32 %s18, 1
        // Predicated region
        $region13: #{tpu_custom_call.1} parent=11 // pred_check
          %p278 = pneg %p39
        $region14: #{tpu_custom_call.1} parent=11 // pred_check_branch
          %280 = sbr.rel (%p278) target = $region16
        $region15: #{tpu_custom_call.1} parent=11 // pred_region
          %s282 = ssub.s32 512, 512
          %283 = vsyncadd [#allocation3], %s282
          %s284 = sshll.u32 [#allocation2], 4
          %s285 = int_to_ptr.vmem [resolvable:$true] %s284
          %290 = dma.hbm_to_vmem [thread:$0]  %s0, 512, %s285, [#allocation3], 128, 128, 8
        $region16: #{tpu_custom_call.1} parent=11 // pred_fallthru
          _
        // Predicated region
        $region17: #{tpu_custom_call.1} parent=11 // pred_check
          %p291 = pneg %p60
        $region18: #{tpu_custom_call.1} parent=11 // pred_check_branch
          %293 = sbr.rel (%p291) target = $region20
        $region19: #{tpu_custom_call.1} parent=11 // pred_region
          %s295 = ssub.s32 512, 512
          %296 = vsyncadd [#allocation6], %s295
          %s297 = sshll.u32 [#allocation5], 4
          %s298 = int_to_ptr.vmem [resolvable:$true] %s297
          %303 = dma.hbm_to_vmem [thread:$0]  %s1, 512, %s298, [#allocation6], 128, 128, 8
        $region20: #{tpu_custom_call.1} parent=11 // pred_fallthru
          _
      $region12: #{tpu_custom_call.1} parent=5 // pred_fallthru
        _
      %p304 = scmp.lt.s32.totalorder %s18, 2
      // Predicated region
      $region21: #{tpu_custom_call.1} parent=5 // pred_check
        %p305 = pneg %p304
      $region22: #{tpu_custom_call.1} parent=5 // pred_check_branch
        %307 = sbr.rel (%p305) target = $region24
      $region23: #{tpu_custom_call.1} parent=5 // pred_region
        // Predicated region
        $region25: #{tpu_custom_call.1} parent=23 // pred_check
          %p308 = pneg %p80
        $region26: #{tpu_custom_call.1} parent=23 // pred_check_branch
          %310 = sbr.rel (%p308) target = $region28
        $region27: #{tpu_custom_call.1} parent=23 // pred_region
          %s311 = sand.u32 %s18, 1
          %s312 = scalar_lea.sflag [#allocation3], %s311
          %s313 = sand.u32 %s70, 1
          %s314 = smul.addr %s313, 32
          %s315 = scalar_lea.vmem [#allocation7], %s314
          %s317 = ssub.s32 512, 512
          %318 = vsyncadd %s312, %s317
          %s319 = smul.addr %s18, 4
          %s320 = smul.addr %s319, 128
          %s321 = scalar_lea.hbm %s2, %s320
          %s322 = sshll.u32 %s315, 4
          %s323 = int_to_ptr.vmem [resolvable:$true] %s322
          %328 = dma.hbm_to_vmem [thread:$0]  %s321, 512, %s323, %s312, 128, 128, 8
        $region28: #{tpu_custom_call.1} parent=23 // pred_fallthru
          _
        // Predicated region
        $region29: #{tpu_custom_call.1} parent=23 // pred_check
          %p329 = pneg %p106
        $region30: #{tpu_custom_call.1} parent=23 // pred_check_branch
          %331 = sbr.rel (%p329) target = $region32
        $region31: #{tpu_custom_call.1} parent=23 // pred_region
          %s332 = sand.u32 %s18, 1
          %s333 = scalar_lea.sflag [#allocation3], %s332
          %s334 = sand.u32 %s96, 1
          %s335 = smul.addr %s334, 128
          %s336 = scalar_lea.vmem [#allocation8], %s335
          %s338 = ssub.s32 2048, 2048
          %339 = vsyncadd %s333, %s338
          %s340 = smul.addr %s18, 16
          %s341 = smul.addr %s340, 128
          %s342 = scalar_lea.hbm %s3, %s341
          %s343 = sshll.u32 %s336, 4
          %s344 = int_to_ptr.vmem [resolvable:$true] %s343
          %349 = dma.hbm_to_vmem [thread:$0]  %s342, 2048, %s344, %s333, 128, 128, 8
        $region32: #{tpu_custom_call.1} parent=23 // pred_fallthru
          _
        // Predicated region
        $region33: #{tpu_custom_call.1} parent=23 // pred_check
          %p350 = pneg %p132
        $region34: #{tpu_custom_call.1} parent=23 // pred_check_branch
          %352 = sbr.rel (%p350) target = $region36
        $region35: #{tpu_custom_call.1} parent=23 // pred_region
          %p353 = scmp.lt.s32.totalorder %s18, 1
          %s354 = scalar_select %p353, %s18, 1
          %s355 = scalar_lea.vmem %s4, %s354
        $region36: #{tpu_custom_call.1} parent=23 // pred_fallthru
          _
        // Predicated region
        $region37: #{tpu_custom_call.1} parent=23 // pred_check
          %p356 = pneg %p158
        $region38: #{tpu_custom_call.1} parent=23 // pred_check_branch
          %358 = sbr.rel (%p356) target = $region40
        $region39: #{tpu_custom_call.1} parent=23 // pred_region
          %s359 = sand.u32 %s18, 1
          %s360 = scalar_lea.sflag [#allocation3], %s359
          %s361 = sand.u32 %s148, 1
          %s362 = smul.addr %s361, 128
          %s363 = scalar_lea.vmem [#allocation9], %s362
          %s365 = ssub.s32 2048, 2048
          %366 = vsyncadd %s360, %s365
          %s367 = smul.addr %s18, 16
          %s368 = smul.addr %s367, 128
          %s369 = scalar_lea.hbm %s5, %s368
          %s370 = sshll.u32 %s363, 4
          %s371 = int_to_ptr.vmem [resolvable:$true] %s370
          %376 = dma.hbm_to_vmem [thread:$0]  %s369, 2048, %s371, %s360, 128, 128, 8
        $region40: #{tpu_custom_call.1} parent=23 // pred_fallthru
          _
        // Predicated region
        $region41: #{tpu_custom_call.1} parent=23 // pred_check
          %p377 = pneg %p184
        $region42: #{tpu_custom_call.1} parent=23 // pred_check_branch
          %379 = sbr.rel (%p377) target = $region44
        $region43: #{tpu_custom_call.1} parent=23 // pred_region
          %p380 = scmp.lt.s32.totalorder %s18, 1
          %s381 = scalar_select %p380, %s18, 1
          %s382 = scalar_lea.vmem %s6, %s381
        $region44: #{tpu_custom_call.1} parent=23 // pred_fallthru
          _
        // Predicated region
        $region45: #{tpu_custom_call.1} parent=23 // pred_check
          %p383 = pneg %p210
        $region46: #{tpu_custom_call.1} parent=23 // pred_check_branch
          %385 = sbr.rel (%p383) target = $region48
        $region47: #{tpu_custom_call.1} parent=23 // pred_region
          %p386 = scmp.lt.s32.totalorder %s18, 1
          %s387 = scalar_select %p386, %s18, 1
          %s388 = scalar_lea.vmem %s7, %s387
        $region48: #{tpu_custom_call.1} parent=23 // pred_fallthru
          _
        // Predicated region
        $region49: #{tpu_custom_call.1} parent=23 // pred_check
          %p389 = pneg %p236
        $region50: #{tpu_custom_call.1} parent=23 // pred_check_branch
          %391 = sbr.rel (%p389) target = $region52
        $region51: #{tpu_custom_call.1} parent=23 // pred_region
          %p392 = scmp.lt.s32.totalorder %s18, 1
          %s393 = scalar_select %p392, %s18, 1
          %s394 = scalar_lea.vmem %s8, %s393
        $region52: #{tpu_custom_call.1} parent=23 // pred_fallthru
          _
      $region24: #{tpu_custom_call.1} parent=5 // pred_fallthru
        _
      %p395 = scmp.le.s32.totalorder 1, %s18
      %p396 = scmp.lt.s32.totalorder %s18, 3
      %p397 = pnand %p395, %p396
      %p398 = pneg %p397
      // Predicated region
      $region53: #{tpu_custom_call.1} parent=5 // pred_check
        _
      $region54: #{tpu_custom_call.1} parent=5 // pred_check_branch
        %400 = sbr.rel (%p397) target = $region56
      $region55: #{tpu_custom_call.1} parent=5 // pred_region
        %s401 = ssub.s32 %s18, 1
        // Predicated region
        $region57: #{tpu_custom_call.1} parent=55 // pred_check
          %p402 = pneg %p39
        $region58: #{tpu_custom_call.1} parent=55 // pred_check_branch
          %404 = sbr.rel (%p402) target = $region60
        $region59: #{tpu_custom_call.1} parent=55 // pred_region
          %405 = dma.done [#allocation3], 512
        $region60: #{tpu_custom_call.1} parent=55 // pred_fallthru
          _
        // Predicated region
        $region61: #{tpu_custom_call.1} parent=55 // pred_check
          %p406 = pneg %p60
        $region62: #{tpu_custom_call.1} parent=55 // pred_check_branch
          %408 = sbr.rel (%p406) target = $region64
        $region63: #{tpu_custom_call.1} parent=55 // pred_region
          %409 = dma.done [#allocation6], 512
        $region64: #{tpu_custom_call.1} parent=55 // pred_fallthru
          _
        %s410 = sand.u32 %s23, 1
        %s411 = scalar_lea.sflag [#allocation3], %s410
        %s412 = sand.u32 %s73, 1
        %s413 = smul.addr %s412, 32
        %s414 = scalar_lea.vmem [#allocation7], %s413
        // Predicated region
        $region65: #{tpu_custom_call.1} parent=55 // pred_check
          %p415 = pneg %p86
        $region66: #{tpu_custom_call.1} parent=55 // pred_check_branch
          %417 = sbr.rel (%p415) target = $region68
        $region67: #{tpu_custom_call.1} parent=55 // pred_region
          %418 = dma.done %s411, 512
        $region68: #{tpu_custom_call.1} parent=55 // pred_fallthru
          _
        %s419 = sand.u32 %s23, 1
        %s420 = scalar_lea.sflag [#allocation3], %s419
        %s421 = sand.u32 %s99, 1
        %s422 = smul.addr %s421, 128
        %s423 = scalar_lea.vmem [#allocation8], %s422
        // Predicated region
        $region69: #{tpu_custom_call.1} parent=55 // pred_check
          %p424 = pneg %p112
        $region70: #{tpu_custom_call.1} parent=55 // pred_check_branch
          %426 = sbr.rel (%p424) target = $region72
        $region71: #{tpu_custom_call.1} parent=55 // pred_region
          %427 = dma.done %s420, 2048
        $region72: #{tpu_custom_call.1} parent=55 // pred_fallthru
          _
        %s428 = sand.u32 %s23, 1
        %s429 = scalar_lea.sflag [#allocation3], %s428
        %s430 = sand.u32 %s151, 1
        %s431 = smul.addr %s430, 128
        %s432 = scalar_lea.vmem [#allocation9], %s431
        // Predicated region
        $region73: #{tpu_custom_call.1} parent=55 // pred_check
          %p433 = pneg %p164
        $region74: #{tpu_custom_call.1} parent=55 // pred_check_branch
          %435 = sbr.rel (%p433) target = $region76
        $region75: #{tpu_custom_call.1} parent=55 // pred_region
          %436 = dma.done %s429, 2048
        $region76: #{tpu_custom_call.1} parent=55 // pred_fallthru
          _
        %p437 = pneg %p39
        %p438 = pneg %p36
        %p439 = pneg %p60
        %p440 = pneg %p57
        %s441 = sand.u32 %s23, 1
        %s442 = scalar_lea.sflag [#allocation3], %s441
        %s443 = sand.u32 %s73, 1
        %s444 = smul.addr %s443, 32
        %s445 = scalar_lea.vmem [#allocation7], %s444
        %p446 = pneg %p86
        %p447 = pneg %p83
        %s448 = sand.u32 %s23, 1
        %s449 = scalar_lea.sflag [#allocation3], %s448
        %s450 = sand.u32 %s99, 1
        %s451 = smul.addr %s450, 128
        %s452 = scalar_lea.vmem [#allocation8], %s451
        %p453 = pneg %p112
        %p454 = pneg %p109
        %p455 = scmp.lt.s32.totalorder %s23, 1
        %s456 = scalar_select %p455, %s23, 1
        %s457 = scalar_lea.vmem %s4, %s456
        %p458 = pneg %p138
        %p459 = pneg %p135
        %s460 = sand.u32 %s23, 1
        %s461 = scalar_lea.sflag [#allocation3], %s460
        %s462 = sand.u32 %s151, 1
        %s463 = smul.addr %s462, 128
        %s464 = scalar_lea.vmem [#allocation9], %s463
        %p465 = pneg %p164
        %p466 = pneg %p161
        %p467 = scmp.lt.s32.totalorder %s23, 1
        %s468 = scalar_select %p467, %s23, 1
        %s469 = scalar_lea.vmem %s6, %s468
        %p470 = pneg %p190
        %p471 = pneg %p187
        %p472 = scmp.lt.s32.totalorder %s23, 1
        %s473 = scalar_select %p472, %s23, 1
        %s474 = scalar_lea.vmem %s7, %s473
        %p475 = pneg %p216
        %p476 = pneg %p213
        %p477 = scmp.lt.s32.totalorder %s23, 1
        %s478 = scalar_select %p477, %s23, 1
        %s479 = scalar_lea.vmem %s8, %s478
        %p480 = pneg %p242
        %p481 = pneg %p239
        %p482 = pneg %p263
        %p483 = pneg %p260
        %p484 = scmp.lt.s32.totalorder %s23, 1
        %s485 = scalar_select %p484, %s23, 1
        %s486 = scalar_lea.vmem %s4, %s485
        %p487 = scmp.lt.s32.totalorder %s23, 1
        %s488 = scalar_select %p487, %s23, 1
        %s489 = scalar_lea.vmem %s6, %s488
        %p490 = scmp.lt.s32.totalorder %s23, 1
        %s491 = scalar_select %p490, %s23, 1
        %s492 = scalar_lea.vmem %s7, %s491
        %p493 = scmp.lt.s32.totalorder %s23, 1
        %s494 = scalar_select %p493, %s23, 1
        %s495 = scalar_lea.vmem %s8, %s494
        %p496 = scmp.eq.s32.totalorder %s23, 0
        // Predicated region
        $region77: #{tpu_custom_call.1} parent=55 // pred_check
          %p497 = pneg %p496
        $region78: #{tpu_custom_call.1} parent=55 // pred_check_branch
          %499 = sbr.rel (%p497) target = $region80
        $region79: #{tpu_custom_call.1} parent=55 // pred_region
          %v500 = vld [vmem:[#allocation2] sm:$0xff]
          %v501 = vld [vmem:[#allocation2 + $0x8] sm:$0xff]
          %v502 = vld [vmem:[#allocation2 + $0x10] sm:$0xff]
          %v503 = vld [vmem:[#allocation2 + $0x18] sm:$0xff]
          %504 = vst [vmem:[#allocation10] sm:$0xff] %v500
          %505 = vst [vmem:[#allocation10 + $0x8] sm:$0xff] %v501
          %506 = vst [vmem:[#allocation10 + $0x10] sm:$0xff] %v502
          %507 = vst [vmem:[#allocation10 + $0x18] sm:$0xff] %v503
        $region80: #{tpu_custom_call.1} parent=55 // pred_fallthru
          _
        %v508 = vld [vmem:[#allocation10] sm:$0xff]
        %v509 = vld [vmem:[#allocation10 + $0x8] sm:$0xff]
        %v510 = vld [vmem:[#allocation10 + $0x10] sm:$0xff]
        %v511 = vld [vmem:[#allocation10 + $0x18] sm:$0xff]
        %v512 = vld [vmem:[#allocation5] sm:$0xff]
        %v513 = vld [vmem:[#allocation5 + $0x8] sm:$0xff]
        %v514 = vld [vmem:[#allocation5 + $0x10] sm:$0xff]
        %v515 = vld [vmem:[#allocation5 + $0x18] sm:$0xff]
        %v516 = vld [vmem:[%s414] sm:$0xff]
        %v517 = vld [vmem:[%s414 + $0x8] sm:$0xff]
        %v518 = vld [vmem:[%s414 + $0x10] sm:$0xff]
        %v519 = vld [vmem:[%s414 + $0x18] sm:$0xff]
        %vm520 = vcmask 261120
        %v522 = vsel %vm520, %v512, 0
        %v525 = vsel %vm520, %v513, 0
        %v528 = vsel %vm520, %v514, 0
        %v531 = vsel %vm520, %v515, 0
        %533 = vmatprep.subr.mxu0 0.0
        %534 = vmatpush1.msra.mxu0 %v508
        %535 = vmatprep.subr.mxu0 0.0
        %536 = vmatpush1.msra.mxu0 %v509
        %537 = vmatprep.subr.mxu0 0.0
        %538 = vmatpush1.msra.mxu0 %v510
        %539 = vmatprep.subr.mxu0 0.0
        %540 = vmatpush1.msra.mxu0 %v511
        %541 = vmatprep.subr.mxu0 0.0
        %542 = vmatpush1.msra.mxu0 0.0
        %543 = vmatprep.subr.mxu0 0.0
        %544 = vmatpush1.msra.mxu0 0.0
        %545 = vmatprep.subr.mxu0 0.0
        %546 = vmatpush1.msra.mxu0 0.0
        %547 = vmatprep.subr.mxu0 0.0
        %548 = vmatpush1.msra.mxu0 0.0
        %549 = vmatprep.subr.mxu0 0.0
        %550 = vmatpush1.msra.mxu0 0.0
        %551 = vmatprep.subr.mxu0 0.0
        %552 = vmatpush1.msra.mxu0 0.0
        %553 = vmatprep.subr.mxu0 0.0
        %554 = vmatpush1.msra.mxu0 0.0
        %555 = vmatprep.subr.mxu0 0.0
        %556 = vmatpush1.msra.mxu0 0.0
        %557 = vmatprep.subr.mxu0 0.0
        %558 = vmatpush1.msra.mxu0 0.0
        %559 = vmatprep.subr.mxu0 0.0
        %560 = vmatpush1.msra.mxu0 0.0
        %561 = vmatprep.subr.mxu0 0.0
        %562 = vmatpush1.msra.mxu0 0.0
        %563 = vmatprep.subr.mxu0 0.0
        %564 = vmatpush1.msra.mxu0 0.0
        %565 = vmatprep.subr.mxu0 0.0
        %566 = vmatpush1.msra.mxu0 0.0
        %567 = vmatprep.subr.mxu0 0.0
        %568 = vmatpush1.msra.mxu0 0.0
        %569 = vmatprep.subr.mxu0 0.0
        %570 = vmatpush1.msra.mxu0 0.0
        %571 = vmatprep.subr.mxu0 0.0
        %572 = vmatpush1.msra.mxu0 0.0
        %573 = vmatprep.subr.mxu0 0.0
        %574 = vmatpush1.msra.mxu0 0.0
        %575 = vmatprep.subr.mxu0 0.0
        %576 = vmatpush1.msra.mxu0 0.0
        %577 = vmatprep.subr.mxu0 0.0
        %578 = vmatpush1.msra.mxu0 0.0
        %579 = vmatprep.subr.mxu0 0.0
        %580 = vmatpush1.msra.mxu0 0.0
        %581 = vmatprep.subr.mxu0 0.0
        %582 = vmatpush1.msra.mxu0 0.0
        %583 = vmatprep.subr.mxu0 0.0
        %584 = vmatpush1.msra.mxu0 0.0
        %585 = vmatprep.subr.mxu0 0.0
        %586 = vmatpush1.msra.mxu0 0.0
        %587 = vmatprep.subr.mxu0 0.0
        %588 = vmatpush1.msra.mxu0 0.0
        %589 = vmatprep.subr.mxu0 0.0
        %590 = vmatpush1.msra.mxu0 0.0
        %591 = vmatprep.subr.mxu0 0.0
        %592 = vmatpush1.msra.mxu0 0.0
        %593 = vmatprep.subr.mxu0 0.0
        %594 = vmatpush1.msra.mxu0 0.0
        %595 = vmatprep.subr.mxu0 0.0
        %596 = vmatpush1.msra.mxu0 0.0
        %597 = vmatprep.mubr.f32.mxu0 0.0
        %598 = vmatmul.mubr.f32.gmra.mrb[0].mxu0 %v522
        %v599 = vpop.f32.mrb[0].mxu0
        %v600 = vadd.f32 %v516, %v599
        %v601 = vpop.f32.mrb[0].mxu0
        %602 = vmatprep.mubr.f32.mxu0 0.0
        %603 = vmatmul.mubr.f32.gmra.mrb[0].mxu0 %v525
        %v604 = vpop.f32.mrb[0].mxu0
        %v605 = vadd.f32 %v517, %v604
        %v606 = vpop.f32.mrb[0].mxu0
        %607 = vmatprep.mubr.f32.mxu0 0.0
        %608 = vmatmul.mubr.f32.gmra.mrb[0].mxu0 %v528
        %v609 = vpop.f32.mrb[0].mxu0
        %v610 = vadd.f32 %v518, %v609
        %v611 = vpop.f32.mrb[0].mxu0
        %612 = vmatprep.mubr.f32.mxu0 0.0
        %613 = vmatmul.mubr.f32.gmra.mrb[0].mxu0 %v531
        %v614 = vpop.f32.mrb[0].mxu0
        %v615 = vadd.f32 %v519, %v614
        %v616 = vpop.f32.mrb[0].mxu0
        %617 = vdwg.mxu0
        %v618 = vld [vmem:[%s423] sm:$0xff]
        %v619 = vld [vmem:[%s423 + $0x8] sm:$0xff]
        %v620 = vld [vmem:[%s423 + $0x10] sm:$0xff]
        %v621 = vld [vmem:[%s423 + $0x18] sm:$0xff]
        %v622 = vld [vmem:[%s423 + $0x20] sm:$0xff]
        %v623 = vld [vmem:[%s423 + $0x28] sm:$0xff]
        %v624 = vld [vmem:[%s423 + $0x30] sm:$0xff]
        %v625 = vld [vmem:[%s423 + $0x38] sm:$0xff]
        %v626 = vld [vmem:[%s423 + $0x40] sm:$0xff]
        %v627 = vld [vmem:[%s423 + $0x48] sm:$0xff]
        %v628 = vld [vmem:[%s423 + $0x50] sm:$0xff]
        %v629 = vld [vmem:[%s423 + $0x58] sm:$0xff]
        %v630 = vld [vmem:[%s423 + $0x60] sm:$0xff]
        %v631 = vld [vmem:[%s423 + $0x68] sm:$0xff]
        %v632 = vld [vmem:[%s423 + $0x70] sm:$0xff]
        %v633 = vld [vmem:[%s423 + $0x78] sm:$0xff]
        %v634 = vld [vmem:[%s486] sm:$0x1]
        %v636 = vlaneseq
        %v637 = vshrl.u32 %v636, 7
        %v638 = vsub.s32 0, %v637
        %v639 = vrot.slane %v634, %v638
        %641 = vmatprep.subr.mxu0 0.0
        %642 = vmatpush1.msra.mxu0 %v618
        %643 = vmatprep.subr.mxu0 0.0
        %644 = vmatpush1.msra.mxu0 %v619
        %645 = vmatprep.subr.mxu0 0.0
        %646 = vmatpush1.msra.mxu0 %v620
        %647 = vmatprep.subr.mxu0 0.0
        %648 = vmatpush1.msra.mxu0 %v621
        %649 = vmatprep.subr.mxu0 0.0
        %650 = vmatpush1.msra.mxu0 %v622
        %651 = vmatprep.subr.mxu0 0.0
        %652 = vmatpush1.msra.mxu0 %v623
        %653 = vmatprep.subr.mxu0 0.0
        %654 = vmatpush1.msra.mxu0 %v624
        %655 = vmatprep.subr.mxu0 0.0
        %656 = vmatpush1.msra.mxu0 %v625
        %657 = vmatprep.subr.mxu0 0.0
        %658 = vmatpush1.msra.mxu0 %v626
        %659 = vmatprep.subr.mxu0 0.0
        %660 = vmatpush1.msra.mxu0 %v627
        %661 = vmatprep.subr.mxu0 0.0
        %662 = vmatpush1.msra.mxu0 %v628
        %663 = vmatprep.subr.mxu0 0.0
        %664 = vmatpush1.msra.mxu0 %v629
        %665 = vmatprep.subr.mxu0 0.0
        %666 = vmatpush1.msra.mxu0 %v630
        %667 = vmatprep.subr.mxu0 0.0
        %668 = vmatpush1.msra.mxu0 %v631
        %669 = vmatprep.subr.mxu0 0.0
        %670 = vmatpush1.msra.mxu0 %v632
        %671 = vmatprep.subr.mxu0 0.0
        %672 = vmatpush1.msra.mxu0 %v633
        %673 = vmatprep.subr.mxu0 0.0
        %674 = vmatpush1.msra.mxu0 0.0
        %675 = vmatprep.subr.mxu0 0.0
        %676 = vmatpush1.msra.mxu0 0.0
        %677 = vmatprep.subr.mxu0 0.0
        %678 = vmatpush1.msra.mxu0 0.0
        %679 = vmatprep.subr.mxu0 0.0
        %680 = vmatpush1.msra.mxu0 0.0
        %681 = vmatprep.subr.mxu0 0.0
        %682 = vmatpush1.msra.mxu0 0.0
        %683 = vmatprep.subr.mxu0 0.0
        %684 = vmatpush1.msra.mxu0 0.0
        %685 = vmatprep.subr.mxu0 0.0
        %686 = vmatpush1.msra.mxu0 0.0
        %687 = vmatprep.subr.mxu0 0.0
        %688 = vmatpush1.msra.mxu0 0.0
        %689 = vmatprep.subr.mxu0 0.0
        %690 = vmatpush1.msra.mxu0 0.0
        %691 = vmatprep.subr.mxu0 0.0
        %692 = vmatpush1.msra.mxu0 0.0
        %693 = vmatprep.subr.mxu0 0.0
        %694 = vmatpush1.msra.mxu0 0.0
        %695 = vmatprep.subr.mxu0 0.0
        %696 = vmatpush1.msra.mxu0 0.0
        %697 = vmatprep.subr.mxu0 0.0
        %698 = vmatpush1.msra.mxu0 0.0
        %699 = vmatprep.subr.mxu0 0.0
        %700 = vmatpush1.msra.mxu0 0.0
        %701 = vmatprep.subr.mxu0 0.0
        %702 = vmatpush1.msra.mxu0 0.0
        %703 = vmatprep.subr.mxu0 0.0
        %704 = vmatpush1.msra.mxu0 0.0
        %705 = vmatprep.mubr.f32.mxu0 0.0
        %706 = vmatmul.mubr.f32.gmra.mrb[0].mxu0 %v600
        %v707 = vpop.f32.mrb[0].mxu0
        %v708 = vadd.f32 %v639, %v707
        %v709 = vpop.f32.mrb[0].mxu0
        %710 = vmatprep.mubr.f32.mxu0 0.0
        %711 = vmatmul.mubr.f32.gmra.mrb[0].mxu0 %v605
        %v712 = vpop.f32.mrb[0].mxu0
        %v713 = vadd.f32 %v639, %v712
        %v714 = vpop.f32.mrb[0].mxu0
        %715 = vmatprep.mubr.f32.mxu0 0.0
        %716 = vmatmul.mubr.f32.gmra.mrb[0].mxu0 %v610
        %v717 = vpop.f32.mrb[0].mxu0
        %v718 = vadd.f32 %v639, %v717
        %v719 = vpop.f32.mrb[0].mxu0
        %720 = vmatprep.mubr.f32.mxu0 0.0
        %721 = vmatmul.mubr.f32.gmra.mrb[0].mxu0 %v615
        %v722 = vpop.f32.mrb[0].mxu0
        %v723 = vadd.f32 %v639, %v722
        %v724 = vpop.f32.mrb[0].mxu0
        %725 = vdwg.mxu0
        %v726 = vmax.f32 %v708, 0.0
        %v727 = vmax.f32 %v713, 0.0
        %v728 = vmax.f32 %v718, 0.0
        %v729 = vmax.f32 %v723, 0.0
        %v730 = vld [vmem:[%s432] sm:$0xff]
        %v731 = vld [vmem:[%s432 + $0x8] sm:$0xff]
        %v732 = vld [vmem:[%s432 + $0x10] sm:$0xff]
        %v733 = vld [vmem:[%s432 + $0x18] sm:$0xff]
        %v734 = vld [vmem:[%s432 + $0x20] sm:$0xff]
        %v735 = vld [vmem:[%s432 + $0x28] sm:$0xff]
        %v736 = vld [vmem:[%s432 + $0x30] sm:$0xff]
        %v737 = vld [vmem:[%s432 + $0x38] sm:$0xff]
        %v738 = vld [vmem:[%s432 + $0x40] sm:$0xff]
        %v739 = vld [vmem:[%s432 + $0x48] sm:$0xff]
        %v740 = vld [vmem:[%s432 + $0x50] sm:$0xff]
        %v741 = vld [vmem:[%s432 + $0x58] sm:$0xff]
        %v742 = vld [vmem:[%s432 + $0x60] sm:$0xff]
        %v743 = vld [vmem:[%s432 + $0x68] sm:$0xff]
        %v744 = vld [vmem:[%s432 + $0x70] sm:$0xff]
        %v745 = vld [vmem:[%s432 + $0x78] sm:$0xff]
        %v746 = vld [vmem:[%s489] sm:$0x1]
        %v748 = vlaneseq
        %v749 = vshrl.u32 %v748, 7
        %v750 = vsub.s32 0, %v749
        %v751 = vrot.slane %v746, %v750
        %753 = vmatprep.subr.mxu0 0.0
        %754 = vmatpush1.msra.mxu0 %v730
        %755 = vmatprep.subr.mxu0 0.0
        %756 = vmatpush1.msra.mxu0 %v731
        %757 = vmatprep.subr.mxu0 0.0
        %758 = vmatpush1.msra.mxu0 %v732
        %759 = vmatprep.subr.mxu0 0.0
        %760 = vmatpush1.msra.mxu0 %v733
        %761 = vmatprep.subr.mxu0 0.0
        %762 = vmatpush1.msra.mxu0 %v734
        %763 = vmatprep.subr.mxu0 0.0
        %764 = vmatpush1.msra.mxu0 %v735
        %765 = vmatprep.subr.mxu0 0.0
        %766 = vmatpush1.msra.mxu0 %v736
        %767 = vmatprep.subr.mxu0 0.0
        %768 = vmatpush1.msra.mxu0 %v737
        %769 = vmatprep.subr.mxu0 0.0
        %770 = vmatpush1.msra.mxu0 %v738
        %771 = vmatprep.subr.mxu0 0.0
        %772 = vmatpush1.msra.mxu0 %v739
        %773 = vmatprep.subr.mxu0 0.0
        %774 = vmatpush1.msra.mxu0 %v740
        %775 = vmatprep.subr.mxu0 0.0
        %776 = vmatpush1.msra.mxu0 %v741
        %777 = vmatprep.subr.mxu0 0.0
        %778 = vmatpush1.msra.mxu0 %v742
        %779 = vmatprep.subr.mxu0 0.0
        %780 = vmatpush1.msra.mxu0 %v743
        %781 = vmatprep.subr.mxu0 0.0
        %782 = vmatpush1.msra.mxu0 %v744
        %783 = vmatprep.subr.mxu0 0.0
        %784 = vmatpush1.msra.mxu0 %v745
        %785 = vmatprep.subr.mxu0 0.0
        %786 = vmatpush1.msra.mxu0 0.0
        %787 = vmatprep.subr.mxu0 0.0
        %788 = vmatpush1.msra.mxu0 0.0
        %789 = vmatprep.subr.mxu0 0.0
        %790 = vmatpush1.msra.mxu0 0.0
        %791 = vmatprep.subr.mxu0 0.0
        %792 = vmatpush1.msra.mxu0 0.0
        %793 = vmatprep.subr.mxu0 0.0
        %794 = vmatpush1.msra.mxu0 0.0
        %795 = vmatprep.subr.mxu0 0.0
        %796 = vmatpush1.msra.mxu0 0.0
        %797 = vmatprep.subr.mxu0 0.0
        %798 = vmatpush1.msra.mxu0 0.0
        %799 = vmatprep.subr.mxu0 0.0
        %800 = vmatpush1.msra.mxu0 0.0
        %801 = vmatprep.subr.mxu0 0.0
        %802 = vmatpush1.msra.mxu0 0.0
        %803 = vmatprep.subr.mxu0 0.0
        %804 = vmatpush1.msra.mxu0 0.0
        %805 = vmatprep.subr.mxu0 0.0
        %806 = vmatpush1.msra.mxu0 0.0
        %807 = vmatprep.subr.mxu0 0.0
        %808 = vmatpush1.msra.mxu0 0.0
        %809 = vmatprep.subr.mxu0 0.0
        %810 = vmatpush1.msra.mxu0 0.0
        %811 = vmatprep.subr.mxu0 0.0
        %812 = vmatpush1.msra.mxu0 0.0
        %813 = vmatprep.subr.mxu0 0.0
        %814 = vmatpush1.msra.mxu0 0.0
        %815 = vmatprep.subr.mxu0 0.0
        %816 = vmatpush1.msra.mxu0 0.0
        %817 = vmatprep.mubr.f32.mxu0 0.0
        %818 = vmatmul.mubr.f32.gmra.mrb[0].mxu0 %v726
        %v819 = vpop.f32.mrb[0].mxu0
        %v820 = vadd.f32 %v751, %v819
        %v821 = vpop.f32.mrb[0].mxu0
        %822 = vmatprep.mubr.f32.mxu0 0.0
        %823 = vmatmul.mubr.f32.gmra.mrb[0].mxu0 %v727
        %v824 = vpop.f32.mrb[0].mxu0
        %v825 = vadd.f32 %v751, %v824
        %v826 = vpop.f32.mrb[0].mxu0
        %827 = vmatprep.mubr.f32.mxu0 0.0
        %828 = vmatmul.mubr.f32.gmra.mrb[0].mxu0 %v728
        %v829 = vpop.f32.mrb[0].mxu0
        %v830 = vadd.f32 %v751, %v829
        %v831 = vpop.f32.mrb[0].mxu0
        %832 = vmatprep.mubr.f32.mxu0 0.0
        %833 = vmatmul.mubr.f32.gmra.mrb[0].mxu0 %v729
        %v834 = vpop.f32.mrb[0].mxu0
        %v835 = vadd.f32 %v751, %v834
        %v836 = vpop.f32.mrb[0].mxu0
        %837 = vdwg.mxu0
        %v838 = vadd.f32 %v820, %v825
        %v839 = vadd.f32 %v838, %v830
        %v840 = vadd.f32 %v839, %v835
        %v841 = vrot.slane %v840, 4
        %v842 = vadd.f32 %v840, %v841
        %v843 = vrot.slane %v842, 2
        %v844 = vadd.f32 %v842, %v843
        %v845 = vrot.slane %v844, 1
        %v846 = vadd.f32 %v844, %v845
        %v847 = vrcp.pop 32.0
        %v848 = vmul.f32 %v846, %v847
        %v849 = vsub.f32 %v820, %v848
        %v850 = vsub.f32 %v825, %v848
        %v851 = vsub.f32 %v830, %v848
        %v852 = vsub.f32 %v835, %v848
        %v853 = vmul.f32 %v849, %v849
        %v854 = vmul.f32 %v850, %v850
        %v855 = vmul.f32 %v851, %v851
        %v856 = vmul.f32 %v852, %v852
        %v857 = vadd.f32 %v853, %v854
        %v858 = vadd.f32 %v857, %v855
        %v859 = vadd.f32 %v858, %v856
        %v860 = vrot.slane %v859, 4
        %v861 = vadd.f32 %v859, %v860
        %v862 = vrot.slane %v861, 2
        %v863 = vadd.f32 %v861, %v862
        %v864 = vrot.slane %v863, 1
        %v865 = vadd.f32 %v863, %v864
        %v866 = vmul.f32 %v865, %v847
        %v867 = vld [vmem:[%s492] sm:$0x1]
        %v868 = vadd.f32 %v866, 1e-05
        %v869 = vrsqrt.pop %v868
        %v870 = vmul.f32 %v867, %v869
        %v871 = vld [vmem:[%s495] sm:$0x1]
        %v872 = vmul.f32 %v848, %v870
        %v873 = vsub.f32 %v871, %v872
        %v875 = vlaneseq
        %v876 = vshrl.u32 %v875, 7
        %v877 = vsub.s32 0, %v876
        %v878 = vrot.slane %v870, %v877
        %v880 = vmul.f32 %v820, %v878
        %v881 = vmul.f32 %v825, %v878
        %v882 = vmul.f32 %v830, %v878
        %v883 = vmul.f32 %v835, %v878
        %v885 = vlaneseq
        %v886 = vshrl.u32 %v885, 7
        %v887 = vsub.s32 0, %v886
        %v888 = vrot.slane %v873, %v887
        %v890 = vadd.f32 %v880, %v888
        %v891 = vadd.f32 %v881, %v888
        %v892 = vadd.f32 %v882, %v888
        %v893 = vadd.f32 %v883, %v888
        %p894 = scmp.eq.s32.totalorder %s23, 1
        // Predicated region
        $region81: #{tpu_custom_call.1} parent=55 // pred_check
          %p895 = pneg %p894
        $region82: #{tpu_custom_call.1} parent=55 // pred_check_branch
          %897 = sbr.rel (%p895) target = $region84
        $region83: #{tpu_custom_call.1} parent=55 // pred_region
          %898 = vst [vmem:[#allocation10] sm:$0xff] %v890
          %899 = vst [vmem:[#allocation10 + $0x8] sm:$0xff] %v891
          %900 = vst [vmem:[#allocation10 + $0x10] sm:$0xff] %v892
          %901 = vst [vmem:[#allocation10 + $0x18] sm:$0xff] %v893
        $region84: #{tpu_custom_call.1} parent=55 // pred_fallthru
          _
        %p902 = scmp.ne.s32.totalorder %s23, 1
        // Predicated region
        $region85: #{tpu_custom_call.1} parent=55 // pred_check
          %p903 = pneg %p902
        $region86: #{tpu_custom_call.1} parent=55 // pred_check_branch
          %905 = sbr.rel (%p903) target = $region88
        $region87: #{tpu_custom_call.1} parent=55 // pred_region
          %v906 = vmax.f32 %v890, 0.0
          %v907 = vmax.f32 %v891, 0.0
          %v908 = vmax.f32 %v892, 0.0
          %v909 = vmax.f32 %v893, 0.0
          %910 = vst [vmem:[#allocation10] sm:$0xff] %v906
          %911 = vst [vmem:[#allocation10 + $0x8] sm:$0xff] %v907
          %912 = vst [vmem:[#allocation10 + $0x10] sm:$0xff] %v908
          %913 = vst [vmem:[#allocation10 + $0x18] sm:$0xff] %v909
        $region88: #{tpu_custom_call.1} parent=55 // pred_fallthru
          _
        // Predicated region
        $region89: #{tpu_custom_call.1} parent=55 // pred_check
          %p914 = pneg %p260
        $region90: #{tpu_custom_call.1} parent=55 // pred_check_branch
          %916 = sbr.rel (%p914) target = $region92
        $region91: #{tpu_custom_call.1} parent=55 // pred_region
          %s918 = ssub.s32 512, 512
          %919 = vsyncadd [#allocation4], %s918
          %s920 = sshll.u32 [#allocation10], 4
          %s921 = int_to_ptr.vmem [resolvable:$true] %s920
          %926 = dma.vmem_to_hbm [thread:$0]  %s921, 512, %s9, [#allocation4], 128, 128, 8
        $region92: #{tpu_custom_call.1} parent=55 // pred_fallthru
          _
        // Predicated region
        $region93: #{tpu_custom_call.1} parent=55 // pred_check
          %p927 = pneg %p260
        $region94: #{tpu_custom_call.1} parent=55 // pred_check_branch
          %929 = sbr.rel (%p927) target = $region96
        $region95: #{tpu_custom_call.1} parent=55 // pred_region
          %930 = dma.done [#allocation4], 512
        $region96: #{tpu_custom_call.1} parent=55 // pred_fallthru
          _
      $region56: #{tpu_custom_call.1} parent=5 // pred_fallthru
        _
      %p931 = scmp.le.s32.totalorder 2, %s18
      // Predicated region
      $region97: #{tpu_custom_call.1} parent=5 // pred_check
        %p932 = pneg %p931
      $region98: #{tpu_custom_call.1} parent=5 // pred_check_branch
        %934 = sbr.rel (%p932) target = $region100
      $region99: #{tpu_custom_call.1} parent=5 // pred_region
        %s935 = ssub.s32 %s18, 2
      $region100: #{tpu_custom_call.1} parent=5 // pred_fallthru
        _
    $region6: #{tpu_custom_call.1} parent=1 // loop_footer
      %s22 = sadd.s32 1, %s18
    $region7: #{tpu_custom_call.1} parent=1 // loop_footer_branch
      %17 = sbr.rel target = $region3
    $region8: #{tpu_custom_call.1} parent=1 // loop_exit
      _
    %936 = vsyncpa [#allocation3], 1
    %s937 = scalar_lea.sflag [#allocation3], 1
    %938 = vsyncpa %s937, 1
    %939 = vsyncpa [#allocation6], 1
    %940 = vsyncpa [#allocation4], 1
    %s941 = scalar_lea.sflag [#allocation4], 1
    %942 = vsyncpa %s941, 1

</llo_original>
